<compile_context>
chip_gen: v5e
topology: v5e:2x2
jax: 0.10.0
libtpu: 0.0.40
codegen_flags: <defaults>
</compile_context>

<pallas_src>
import jax
import jax.numpy as jnp
from jax.experimental import pallas as pl
from jax.experimental.pallas import tpu as pltpu


_SQRT_HALF = 0.7071067811865476


def _round_up(x, m):
    return ((x + m - 1) // m) * m


def _gelu_exact_f32(h):
    # torch.nn.GELU() default (erf form), computed in f32.
    return 0.5 * h * (1.0 + jax.lax.erf(h * jnp.float32(_SQRT_HALF)))


# ----------------------------------------------------------------------------
# Kernels
# ----------------------------------------------------------------------------

def _mlp_kernel_resident(x_ref, w1_ref, b1_ref, w2_ref, b2_ref, o_ref):
    # Full weights resident in VMEM; 1-D grid over row tiles.
    h = jnp.dot(x_ref[...], w1_ref[...], preferred_element_type=jnp.float32)
    h = h + b1_ref[...].astype(jnp.float32)
    h = _gelu_exact_f32(h)
    # dropout p=0.0 -> identity
    h = h.astype(w2_ref.dtype)
    out = jnp.dot(h, w2_ref[...], preferred_element_type=jnp.float32)
    o_ref[...] = (out + b2_ref[...].astype(jnp.float32)).astype(o_ref.dtype)
    # dropout p=0.0 -> identity


def _mlp_kernel_ktiled_acc(x_ref, w1_ref, b1_ref, w2_ref, b2_ref, o_ref, acc_ref):
    # Hidden dim tiled; f32 accumulation in a VMEM scratch (non-f32 outputs).
    k = pl.program_id(1)

    @pl.when(k == 0)
    def _():
        acc_ref[...] = jnp.zeros_like(acc_ref)

    h = jnp.dot(x_ref[...], w1_ref[...], preferred_element_type=jnp.float32)
    h = h + b1_ref[...].astype(jnp.float32)
    h = _gelu_exact_f32(h)
    h = h.astype(w2_ref.dtype)
    acc_ref[...] += jnp.dot(h, w2_ref[...], preferred_element_type=jnp.float32)

    @pl.when(k == pl.num_programs(1) - 1)
    def _():
        o_ref[...] = (acc_ref[...] + b2_ref[...].astype(jnp.float32)).astype(o_ref.dtype)


def _mlp_kernel_ktiled_f32(x_ref, w1_ref, b1_ref, w2_ref, b2_ref, o_ref):
    # Hidden dim tiled; f32 output -> accumulate directly into o_ref (no scratch).
    k = pl.program_id(1)

    @pl.when(k == 0)
    def _():
        o_ref[...] = jnp.zeros_like(o_ref)

    h = jnp.dot(x_ref[...], w1_ref[...], preferred_element_type=jnp.float32)
    h = h + b1_ref[...].astype(jnp.float32)
    h = _gelu_exact_f32(h)
    o_ref[...] += jnp.dot(h, w2_ref[...], preferred_element_type=jnp.float32)

    @pl.when(k == pl.num_programs(1) - 1)
    def _():
        o_ref[...] += b2_ref[...].astype(jnp.float32)


# ----------------------------------------------------------------------------
# Tile selection (generation + VMEM-budget aware)
# ----------------------------------------------------------------------------

def _tpu_generation():
    try:
        kind = jax.devices()[0].device_kind.lower()
    except Exception:
        return None
    if "7" in kind:
        return "v7x"
    if "v6" in kind:
        return "v6e"
    if "v5" in kind:
        return "v5e"
    return None


def _gen_config(gen):
    # (vmem_limit_bytes, tm candidates descending)
    if gen == "v7x":
        return 48 * 1024 * 1024, (1024, 512, 256)
    if gen == "v6e":
        return 100 * 1024 * 1024, (1024, 512, 256)
    if gen == "v5e":
        return 100 * 1024 * 1024, (512, 256)
    return 64 * 1024 * 1024, (512, 256)


def _select_tiles(M, C_pad, H_pad, dbytes, gen):
    vmem_limit, tm_cands = _gen_config(gen)
    budget = vmem_limit - 6 * 1024 * 1024  # headroom for Mosaic internal scratch

    th_cands = [H_pad] + [t for t in (2048, 1024, 512, 256) if t < H_pad]

    def cost(tm, th):
        resident = th == H_pad
        c = 2 * 2 * tm * C_pad * dbytes                              # x + out tiles (double-buffered)
        c += 2 * (C_pad * th + th * C_pad + th + C_pad) * dbytes      # weight/bias slices (double-buffered)
        if not resident:
            c += tm * C_pad * 4                                       # f32 accumulator scratch
        c += tm * th * (4 + dbytes)                                   # fc1 activation (f32 + cast copy)
        return c

    m_cap = _round_up(M, 16)
    for tm in tm_cands:
        tmc = _round_up(min(tm, m_cap), 16)
        for th in th_cands:
            if cost(tmc, th) <= budget:
                return tmc, th, vmem_limit

    # Last resort: smallest reasonable tiles.
    tmc = _round_up(min(256, m_cap), 16)
    return tmc, min(256, H_pad), vmem_limit


# ----------------------------------------------------------------------------
# Wrapper
# ----------------------------------------------------------------------------

def mlp_pallas(x, w1, b1, w2, b2, *, tm=None, th=None):
    """x: (..., C). w1: (C, H), b1: (H,), w2: (H, C), b2: (C,).

    Weights are stored transposed vs. torch's nn.Linear layout so the kernel
    computes x @ W without an in-kernel transpose. Dropout p=0.0 is identity.
    """
    orig_shape = x.shape
    C = orig_shape[-1]
    H = w1.shape[1]
    x2d = x.reshape(-1, C)
    M = x2d.shape[0]
    dbytes = jnp.dtype(x.dtype).itemsize

    # Lane-dense padding targets (last dims -> multiples of 128).
    C_pad = _round_up(C, 128)
    H_pad = _round_up(H, 128)

    gen = _tpu_generation()
    auto_tm, auto_th, vmem_limit = _select_tiles(M, C_pad, H_pad, dbytes, gen)

    if tm is None:
        tm = auto_tm
    else:
        tm = _round_up(max(16, min(tm, _round_up(M, 16))), 16)
    if th is None:
        th = auto_th
    else:
        th = _round_up(max(128, min(th, H_pad)), 128)

    # v7x megacore: keep >= 2 parallel row tiles so both TensorCores get work.
    if gen == "v7x" and M > 256:
        while tm >= 512 and _round_up(M, tm) // tm < 2:
            tm //= 2

    if th >= H_pad:
        th = H_pad                       # resident-weight path
    else:
        H_pad = _round_up(H_pad, th)     # keep full-width MXU tiles (no 128 fallback)

    M_pad = _round_up(M, tm)

    # Zero-pad only when needed (exact: gelu(0)=0, padded weight rows/cols are 0).
    x_p = x2d if (M_pad == M and C_pad == C) else jnp.pad(
        x2d, ((0, M_pad - M), (0, C_pad - C)))
    w1_p = w1 if (C_pad == C and H_pad == H) else jnp.pad(
        w1, ((0, C_pad - C), (0, H_pad - H)))
    b1_2d = b1.reshape(1, H)
    b1_p = b1_2d if H_pad == H else jnp.pad(b1_2d, ((0, 0), (0, H_pad - H)))
    w2_p = w2 if (H_pad == H and C_pad == C) else jnp.pad(
        w2, ((0, H_pad - H), (0, C_pad - C)))
    b2_2d = b2.reshape(1, C)
    b2_p = b2_2d if C_pad == C else jnp.pad(b2_2d, ((0, 0), (0, C_pad - C)))

    if th == H_pad:
        # Resident weights: 1-D grid over row tiles, weights DMA'd once.
        out = pl.pallas_call(
            _mlp_kernel_resident,
            out_shape=jax.ShapeDtypeStruct((M_pad, C_pad), x.dtype),
            grid_spec=pltpu.PrefetchScalarGridSpec(
                num_scalar_prefetch=0,
                grid=(M_pad // tm,),
                in_specs=[
                    pl.BlockSpec((tm, C_pad), lambda i: (i, 0)),       # x rows
                    pl.BlockSpec((C_pad, H_pad), lambda i: (0, 0)),    # w1 (resident)
                    pl.BlockSpec((1, H_pad), lambda i: (0, 0)),        # b1 (resident)
                    pl.BlockSpec((H_pad, C_pad), lambda i: (0, 0)),    # w2 (resident)
                    pl.BlockSpec((1, C_pad), lambda i: (0, 0)),        # b2 (resident)
                ],
                out_specs=pl.BlockSpec((tm, C_pad), lambda i: (i, 0)),
            ),
            compiler_params=pltpu.CompilerParams(
                dimension_semantics=("parallel",),
                vmem_limit_bytes=vmem_limit,
            ),
        )(x_p, w1_p, b1_p, w2_p, b2_p)
    else:
        # Hidden-dim tiled fallback (weights too large for residency).
        if x.dtype == jnp.dtype(jnp.float32):
            kernel = _mlp_kernel_ktiled_f32
            scratch = ()
        else:
            kernel = _mlp_kernel_ktiled_acc
            scratch = (pltpu.VMEM((tm, C_pad), jnp.float32),)
        out = pl.pallas_call(
            kernel,
            out_shape=jax.ShapeDtypeStruct((M_pad, C_pad), x.dtype),
            grid_spec=pltpu.PrefetchScalarGridSpec(
                num_scalar_prefetch=0,
                grid=(M_pad // tm, H_pad // th),
                in_specs=[
                    pl.BlockSpec((tm, C_pad), lambda i, k: (i, 0)),    # x rows (resident over k)
                    pl.BlockSpec((C_pad, th), lambda i, k: (0, k)),    # w1 slice
                    pl.BlockSpec((1, th),     lambda i, k: (0, k)),    # b1 slice
                    pl.BlockSpec((th, C_pad), lambda i, k: (k, 0)),    # w2 slice
                    pl.BlockSpec((1, C_pad),  lambda i, k: (0, 0)),    # b2 (resident)
                ],
                out_specs=pl.BlockSpec((tm, C_pad), lambda i, k: (i, 0)),
                scratch_shapes=scratch,
            ),
            compiler_params=pltpu.CompilerParams(
                dimension_semantics=("parallel", "arbitrary"),
                vmem_limit_bytes=vmem_limit,
            ),
        )(x_p, w1_p, b1_p, w2_p, b2_p)

    if M_pad != M or C_pad != C:
        out = out[:M, :C]
    return out.reshape(orig_shape)


# ----------------------------------------------------------------------------
# Reference + tests
# ----------------------------------------------------------------------------

def _mlp_ref(x, w1, b1, w2, b2):
    h = x.astype(jnp.float32) @ w1.astype(jnp.float32) + b1.astype(jnp.float32)
    h = 0.5 * h * (1.0 + jax.lax.erf(h / jnp.sqrt(2.0)))
    return h @ w2.astype(jnp.float32) + b2.astype(jnp.float32)


def _make_inputs(key, batch, seq, cin, hid, dtype):
    kx, kw1, kb1, kw2, kb2 = jax.random.split(key, 5)
    x = jax.random.normal(kx, (batch, seq, cin), jnp.float32)
    w1 = jax.random.normal(kw1, (cin, hid), jnp.float32) * 0.05
    b1 = jax.random.normal(kb1, (hid,), jnp.float32) * 0.05
    w2 = jax.random.normal(kw2, (hid, cin), jnp.float32) * 0.05
    b2 = jax.random.normal(kb2, (cin,), jnp.float32) * 0.05
    cast = lambda a: a.astype(dtype)
    return (cast(x), cast(w1), cast(b1), cast(w2), cast(b2)), (x, w1, b1, w2, b2)


if __name__ == "__main__":
    key = jax.random.PRNGKey(0)
    k1, k2 = jax.random.split(key)

    # 1) Small shapes (resident-weight path), f32 and bf16.
    (args_f32, ref_args) = _make_inputs(k1, batch=2, seq=8, cin=32, hid=64,
                                        dtype=jnp.float32)
    ref = _mlp_ref(*ref_args)
    out = mlp_pallas(*args_f32)
    jax.block_until_ready(out)
    assert jnp.allclose(out, ref, atol=1e-5, rtol=1e-5), "f32 resident mismatch"

    (args_bf16, _) = _make_inputs(k1, batch=2, seq=8, cin=32, hid=64,
                                  dtype=jnp.bfloat16)
    out_bf16 = mlp_pallas(*args_bf16)
    jax.block_until_ready(out_bf16)
    assert jnp.allclose(out_bf16.astype(jnp.float32), ref, atol=1e-1, rtol=1e-1), \
        "bf16 resident mismatch"

    # 2) Forced hidden-dim-tiled path (explicit small tiles), f32 and bf16.
    (args2_f32, ref2_args) = _make_inputs(k2, batch=2, seq=64, cin=128, hid=512,
                                          dtype=jnp.float32)
    ref2 = _mlp_ref(*ref2_args)
    out2 = mlp_pallas(*args2_f32, tm=64, th=256)
    jax.block_until_ready(out2)
    assert jnp.allclose(out2, ref2, atol=1e-4, rtol=1e-4), "f32 k-tiled mismatch"

    (args2_bf16, _) = _make_inputs(k2, batch=2, seq=64, cin=128, hid=512,
                                   dtype=jnp.bfloat16)
    out2_bf16 = mlp_pallas(*args2_bf16, tm=64, th=256)
    jax.block_until_ready(out2_bf16)
    assert jnp.allclose(out2_bf16.astype(jnp.float32), ref2, atol=1e-1, rtol=1e-1), \
        "bf16 k-tiled mismatch"

    print("KERNEL_OK")
</pallas_src>

<mosaic_0001>
module attributes {stable_mosaic.version = 11 : i64} {
  func.func @_mlp_kernel_resident(%arg0: i32, %arg1: memref<16x128xf32, #tpu.memory_space<vmem>>, %arg2: memref<128x128xf32, #tpu.memory_space<vmem>>, %arg3: memref<1x128xf32, #tpu.memory_space<vmem>>, %arg4: memref<128x128xf32, #tpu.memory_space<vmem>>, %arg5: memref<1x128xf32, #tpu.memory_space<vmem>>, %arg6: memref<16x128xf32, #tpu.memory_space<vmem>>) attributes {dimension_semantics = [#tpu.dimension_semantics<parallel>], iteration_bounds = array<i64: 1>, scalar_prefetch = 0 : i64, scratch_operands = 0 : i64, tpu.core_type = #tpu.core_type<tc>, window_params = [{transform_indices = @transform_0, window_bounds = array<i64: 16, 128>}, {pipeline_mode = #tpu.pipeline_mode<synchronous>, transform_indices = @transform_1, window_bounds = array<i64: 128, 128>}, {pipeline_mode = #tpu.pipeline_mode<synchronous>, transform_indices = @transform_2, window_bounds = array<i64: 1, 128>}, {pipeline_mode = #tpu.pipeline_mode<synchronous>, transform_indices = @transform_3, window_bounds = array<i64: 128, 128>}, {pipeline_mode = #tpu.pipeline_mode<synchronous>, transform_indices = @transform_4, window_bounds = array<i64: 1, 128>}, {transform_indices = @transform_5, window_bounds = array<i64: 16, 128>}]} {
    %c0 = arith.constant 0 : index
    %c0_0 = arith.constant 0 : index
    %0 = vector.load %arg1[%c0, %c0_0] : memref<16x128xf32, #tpu.memory_space<vmem>>, vector<16x128xf32>
    %c0_1 = arith.constant 0 : index
    %c0_2 = arith.constant 0 : index
    %1 = vector.load %arg2[%c0_1, %c0_2] : memref<128x128xf32, #tpu.memory_space<vmem>>, vector<128x128xf32>
    %cst = arith.constant dense<0.000000e+00> : vector<16x128xf32>
    %2 = tpu.matmul %0, %1, %cst {dimension_numbers = #tpu.dot_dimension_numbers<[1], [0], [0], [1], [0, 0, 1, 1], [], []>} : vector<16x128xf32>, vector<128x128xf32>, vector<16x128xf32> -> vector<16x128xf32>
    %c0_3 = arith.constant 0 : index
    %c0_4 = arith.constant 0 : index
    %3 = vector.load %arg3[%c0_3, %c0_4] : memref<1x128xf32, #tpu.memory_space<vmem>>, vector<1x128xf32>
    %4 = vector.broadcast %3 : vector<1x128xf32> to vector<16x128xf32>
    %5 = arith.addf %2, %4 : vector<16x128xf32>
    %cst_5 = arith.constant 5.000000e-01 : f32
    %6 = vector.broadcast %cst_5 : f32 to vector<16x128xf32>
    %7 = arith.mulf %6, %5 : vector<16x128xf32>
    %cst_6 = arith.constant 0.707106769 : f32
    %8 = vector.broadcast %cst_6 : f32 to vector<16x128xf32>
    %9 = arith.mulf %5, %8 : vector<16x128xf32>
    %10 = math.erf %9 : vector<16x128xf32>
    %cst_7 = arith.constant 1.000000e+00 : f32
    %11 = vector.broadcast %cst_7 : f32 to vector<16x128xf32>
    %12 = arith.addf %11, %10 : vector<16x128xf32>
    %13 = arith.mulf %7, %12 : vector<16x128xf32>
    %c0_8 = arith.constant 0 : index
    %c0_9 = arith.constant 0 : index
    %14 = vector.load %arg4[%c0_8, %c0_9] : memref<128x128xf32, #tpu.memory_space<vmem>>, vector<128x128xf32>
    %cst_10 = arith.constant dense<0.000000e+00> : vector<16x128xf32>
    %15 = tpu.matmul %13, %14, %cst_10 {dimension_numbers = #tpu.dot_dimension_numbers<[1], [0], [0], [1], [0, 0, 1, 1], [], []>} : vector<16x128xf32>, vector<128x128xf32>, vector<16x128xf32> -> vector<16x128xf32>
    %c0_11 = arith.constant 0 : index
    %c0_12 = arith.constant 0 : index
    %16 = vector.load %arg5[%c0_11, %c0_12] : memref<1x128xf32, #tpu.memory_space<vmem>>, vector<1x128xf32>
    %17 = vector.broadcast %16 : vector<1x128xf32> to vector<16x128xf32>
    %18 = arith.addf %15, %17 : vector<16x128xf32>
    %c0_13 = arith.constant 0 : index
    %c0_14 = arith.constant 0 : index
    %19 = vector.load %arg6[%c0_13, %c0_14] : memref<16x128xf32, #tpu.memory_space<vmem>>, vector<16x128xf32>
    tpu.vector_store %arg6[%c0_13, %c0_14], %18 {strides = array<i32>} : memref<16x128xf32, #tpu.memory_space<vmem>>, vector<16x128xf32>,
    return
  }
  func.func @transform_0(%arg0: i32) -> (i32, i32) {
    %c0_i32 = arith.constant 0 : i32
    %c0_i32_0 = arith.constant 0 : i32
    return %arg0, %c0_i32 : i32, i32
  }
  func.func @transform_1(%arg0: i32) -> (i32, i32) {
    %c0_i32 = arith.constant 0 : i32
    %c0_i32_0 = arith.constant 0 : i32
    %c0_i32_1 = arith.constant 0 : i32
    return %c0_i32, %c0_i32_0 : i32, i32
  }
  func.func @transform_2(%arg0: i32) -> (i32, i32) {
    %c0_i32 = arith.constant 0 : i32
    %c0_i32_0 = arith.constant 0 : i32
    %c0_i32_1 = arith.constant 0 : i32
    return %c0_i32, %c0_i32_0 : i32, i32
  }
  func.func @transform_3(%arg0: i32) -> (i32, i32) {
    %c0_i32 = arith.constant 0 : i32
    %c0_i32_0 = arith.constant 0 : i32
    %c0_i32_1 = arith.constant 0 : i32
    return %c0_i32, %c0_i32_0 : i32, i32
  }
  func.func @transform_4(%arg0: i32) -> (i32, i32) {
    %c0_i32 = arith.constant 0 : i32
    %c0_i32_0 = arith.constant 0 : i32
    %c0_i32_1 = arith.constant 0 : i32
    return %c0_i32, %c0_i32_0 : i32, i32
  }
  func.func @transform_5(%arg0: i32) -> (i32, i32) {
    %c0_i32 = arith.constant 0 : i32
    %c0_i32_0 = arith.constant 0 : i32
    return %arg0, %c0_i32 : i32, i32
  }
}

</mosaic_0001>

<llo_original>
// kernel: tpu_custom_call.1
$region0: #{tpu_custom_call.1}
  #allocation0 [shape = 'u32[]', space=smem, size = 0x4, offset = 0x4, fixed_abs, tag = 'smem constant byte address 0x4 - core index']
  #allocation1 [shape = 'u32[72,128]{1,0:T(1,128)}', space=vmem, size = 0x9000, scoped, tag = 'internal scratch']
  %s0 = inlined_call_operand.hbm [shape: f32[16,128], index: 0, kind: input, shape index: {}]
  %s1 = inlined_call_operand.hbm [shape: f32[128,128], index: 1, kind: input, shape index: {}]
  %s2 = inlined_call_operand.vmem [shape: f32[1,128], index: 2, kind: input, shape index: {}]
  %s3 = inlined_call_operand.hbm [shape: f32[128,128], index: 3, kind: input, shape index: {}]
  %s4 = inlined_call_operand.vmem [shape: f32[1,128], index: 4, kind: input, shape index: {}]
  %s5 = inlined_call_operand.hbm [shape: f32[16,128], index: 5, kind: output, shape index: {}]
  %s6 = sld [smem:[#allocation0]]
  $region42: #{tpu_custom_call.1} parent=0
    _
  %s8 = ssub.s32 1, %s6
  %s9 = scalar_select 0, %s8, %s6
  $region1: #{tpu_custom_call.1} parent=0
    #allocation2 [shape = 'u8[8192]{0}', space=vmem, size = 0x2000, scoped, tag = 'input window, operand 0, single buffered']
    #allocation3 [shape = 's32[1]{0}', space=sflag, size = 0x4, scoped, tag = 'scoped memory for tpu_custom_call.1']
    #allocation4 [shape = 's32[1]{0}', space=sflag, size = 0x4, scoped, tag = 'scoped memory for tpu_custom_call.1']
    #allocation5 [shape = 'u8[65536]{0}', space=vmem, size = 0x10000, scoped, tag = 'input window, operand 1, single buffered']
    #allocation6 [shape = 's32[1]{0}', space=sflag, size = 0x4, scoped, tag = 'scoped memory for tpu_custom_call.1']
    #allocation7 [shape = 'u8[65536]{0}', space=vmem, size = 0x10000, scoped, tag = 'input window, operand 3, single buffered']
    #allocation8 [shape = 'u8[8192]{0}', space=vmem, size = 0x2000, scoped, tag = 'output window, operand 0, single buffered']
    %10 = vsyncpa [#allocation3], 0
    %11 = vsyncpa [#allocation6], 0
    %12 = vsyncpa [#allocation4], 0
    // Predicated region
    $region2: #{tpu_custom_call.1} parent=1 // pred_check
      _
    $region3: #{tpu_custom_call.1} parent=1 // pred_check_branch
      %14 = sbr.rel (0) target = $region5
    $region4: #{tpu_custom_call.1} parent=1 // pred_region
      %16 = vsyncadd [#allocation3], 0
      %s17 = sshll.u32 %s0, 4
      %s18 = int_to_ptr.hbm [resolvable:$true] %s17
      %s19 = sshll.u32 [#allocation2], 4
      %s20 = int_to_ptr.vmem [resolvable:$true] %s19
      %25 = dma.hbm_to_vmem [thread:$0]  %s18, 256, %s20, [#allocation3], 128, 128, 8
    $region5: #{tpu_custom_call.1} parent=1 // pred_fallthru
      _
    // Predicated region
    $region6: #{tpu_custom_call.1} parent=1 // pred_check
      _
    $region7: #{tpu_custom_call.1} parent=1 // pred_check_branch
      %27 = sbr.rel (0) target = $region9
    $region8: #{tpu_custom_call.1} parent=1 // pred_region
      %29 = vsyncadd [#allocation6], 0
      %s30 = sshll.u32 %s1, 4
      %s31 = int_to_ptr.hbm [resolvable:$true] %s30
      %s32 = sshll.u32 [#allocation5], 4
      %s33 = int_to_ptr.vmem [resolvable:$true] %s32
      %38 = dma.hbm_to_vmem [thread:$0]  %s31, 2048, %s33, [#allocation6], 128, 128, 8
    $region9: #{tpu_custom_call.1} parent=1 // pred_fallthru
      _
    // Predicated region
    $region10: #{tpu_custom_call.1} parent=1 // pred_check
      _
    $region11: #{tpu_custom_call.1} parent=1 // pred_check_branch
      %40 = sbr.rel (0) target = $region13
    $region12: #{tpu_custom_call.1} parent=1 // pred_region
      _
    $region13: #{tpu_custom_call.1} parent=1 // pred_fallthru
      _
    // Predicated region
    $region14: #{tpu_custom_call.1} parent=1 // pred_check
      _
    $region15: #{tpu_custom_call.1} parent=1 // pred_check_branch
      %42 = sbr.rel (0) target = $region17
    $region16: #{tpu_custom_call.1} parent=1 // pred_region
      %44 = vsyncadd [#allocation6], 0
      %s45 = sshll.u32 %s3, 4
      %s46 = int_to_ptr.hbm [resolvable:$true] %s45
      %s47 = sshll.u32 [#allocation7], 4
      %s48 = int_to_ptr.vmem [resolvable:$true] %s47
      %53 = dma.hbm_to_vmem [thread:$0]  %s46, 2048, %s48, [#allocation6], 128, 128, 8
    $region17: #{tpu_custom_call.1} parent=1 // pred_fallthru
      _
    // Predicated region
    $region18: #{tpu_custom_call.1} parent=1 // pred_check
      _
    $region19: #{tpu_custom_call.1} parent=1 // pred_check_branch
      %55 = sbr.rel (0) target = $region21
    $region20: #{tpu_custom_call.1} parent=1 // pred_region
      _
    $region21: #{tpu_custom_call.1} parent=1 // pred_fallthru
      _
    // Predicated region
    $region22: #{tpu_custom_call.1} parent=1 // pred_check
      _
    $region23: #{tpu_custom_call.1} parent=1 // pred_check_branch
      %57 = sbr.rel (0) target = $region25
    $region24: #{tpu_custom_call.1} parent=1 // pred_region
      %59 = dma.done [#allocation3], 256
    $region25: #{tpu_custom_call.1} parent=1 // pred_fallthru
      _
    // Predicated region
    $region26: #{tpu_custom_call.1} parent=1 // pred_check
      _
    $region27: #{tpu_custom_call.1} parent=1 // pred_check_branch
      %61 = sbr.rel (0) target = $region29
    $region28: #{tpu_custom_call.1} parent=1 // pred_region
      %63 = dma.done [#allocation6], 2048
    $region29: #{tpu_custom_call.1} parent=1 // pred_fallthru
      _
    // Predicated region
    $region30: #{tpu_custom_call.1} parent=1 // pred_check
      _
    $region31: #{tpu_custom_call.1} parent=1 // pred_check_branch
      %65 = sbr.rel (0) target = $region33
    $region32: #{tpu_custom_call.1} parent=1 // pred_region
      %67 = dma.done [#allocation6], 2048
    $region33: #{tpu_custom_call.1} parent=1 // pred_fallthru
      _
    %v68 = vld [vmem:[#allocation2] sm:$0xff]
    %v69 = vld [vmem:[#allocation2 + $0x8] sm:$0xff]
    %v70 = vld [vmem:[#allocation5] sm:$0xff]
    %v71 = vld [vmem:[#allocation5 + $0x8] sm:$0xff]
    %v72 = vld [vmem:[#allocation5 + $0x10] sm:$0xff]
    %v73 = vld [vmem:[#allocation5 + $0x18] sm:$0xff]
    %v74 = vld [vmem:[#allocation5 + $0x20] sm:$0xff]
    %v75 = vld [vmem:[#allocation5 + $0x28] sm:$0xff]
    %v76 = vld [vmem:[#allocation5 + $0x30] sm:$0xff]
    %v77 = vld [vmem:[#allocation5 + $0x38] sm:$0xff]
    %v78 = vld [vmem:[#allocation5 + $0x40] sm:$0xff]
    %v79 = vld [vmem:[#allocation5 + $0x48] sm:$0xff]
    %v80 = vld [vmem:[#allocation5 + $0x50] sm:$0xff]
    %v81 = vld [vmem:[#allocation5 + $0x58] sm:$0xff]
    %v82 = vld [vmem:[#allocation5 + $0x60] sm:$0xff]
    %v83 = vld [vmem:[#allocation5 + $0x68] sm:$0xff]
    %v84 = vld [vmem:[#allocation5 + $0x70] sm:$0xff]
    %v85 = vld [vmem:[#allocation5 + $0x78] sm:$0xff]
    %v86 = vld [vmem:[%s2] sm:$0x1]
    %v88 = vperm.slane %v86, 0
    %90 = vmatpush.msra.mxu0 %v85
    %91 = vmatpush.msra.mxu0 %v84
    %92 = vmatpush.msra.mxu0 %v83
    %93 = vmatpush.msra.mxu0 %v82
    %94 = vmatpush.msra.mxu0 %v81
    %95 = vmatpush.msra.mxu0 %v80
    %96 = vmatpush.msra.mxu0 %v79
    %97 = vmatpush.msra.mxu0 %v78
    %98 = vmatpush.msra.mxu0 %v77
    %99 = vmatpush.msra.mxu0 %v76
    %100 = vmatpush.msra.mxu0 %v75
    %101 = vmatpush.msra.mxu0 %v74
    %102 = vmatpush.msra.mxu0 %v73
    %103 = vmatpush.msra.mxu0 %v72
    %104 = vmatpush.msra.mxu0 %v71
    %105 = vmatpush.msra.mxu0 %v70
    %106 = vmatmul.f32.gmra.mxu0 %v68
    %v107 = vpop.f32.mrf.mxu0
    %v108 = vadd.f32 %v88, %v107
    %109 = vmatmul.f32.gmra.mxu0 %v69
    %v110 = vpop.f32.mrf.mxu0
    %v111 = vadd.f32 %v88, %v110
    %112 = vdwg.mxu0
    %v113 = vmul.f32 %v108, 0.5
    %v114 = vmul.f32 %v111, 0.5
    %v115 = vmul.f32 %v108, 0.70710677
    %v116 = vmul.f32 %v111, 0.70710677
    %v117 = vmul.f32 %v115, %v115
    %v118 = vmin.f32 16.0, %v117
    %v119 = vmul.f32 %v118, 2.1237322e-06
    %v120 = vadd.f32 %v119, 0.00028619796
    %v121 = vmul.f32 %v118, %v120
    %v122 = vadd.f32 %v121, 0.0036580483
    %v123 = vmul.f32 %v118, %v122
    %v124 = vadd.f32 %v123, 0.05243302
    %v125 = vmul.f32 %v118, %v124
    %v126 = vadd.f32 %v125, 0.18741608
    %v127 = vmul.f32 %v118, %v126
    %v128 = vadd.f32 %v127, 1.1283791
    %v129 = vmul.f32 %v115, %v128
    %v130 = vmul.f32 %v118, 3.8918573e-05
    %v131 = vadd.f32 %v130, 0.001143296
    %v132 = vmul.f32 %v118, %v131
    %v133 = vadd.f32 %v132, 0.014752088
    %v134 = vmul.f32 %v118, %v133
    %v135 = vadd.f32 %v134, 0.112945676
    %v136 = vmul.f32 %v118, %v135
    %v137 = vadd.f32 %v136, 0.4994258
    %v138 = vmul.f32 %v118, %v137
    %v139 = vadd.f32 %v138, 1.0
    %v140 = vrcp.pop %v139
    %v141 = vmul.f32 %v139, %v140
    %v142 = vsub.f32 1.0, %v141
    %v143 = vmul.f32 %v140, %v142
    %v144 = vadd.f32 %v140, %v143
    %vm145 = vweird.f32 %v139
    %vm146 = vweird.f32 %v140
    %vm147 = vmor %vm145, %vm146
    %v148 = vsel %vm147, %v140, %v144
    %v149 = vand.u32 2147483647, %v139
    %vm150 = vcmp.eq.f32.partialorder %v149, 8.507059e+37
    %v151 = vand.u32 %v139, 2147483648
    %v152 = vor.u32 1.1754944e-38, %v151
    %v153 = vsel %vm150, %v152, %v148
    %v154 = vmul.f32 %v129, %v153
    %v155 = vmin.f32 %v154, 1.0
    %v156 = vmax.f32 %v155, -1.0
    %v157 = vmul.f32 %v116, %v116
    %v158 = vmin.f32 16.0, %v157
    %v159 = vmul.f32 %v158, 2.1237322e-06
    %v160 = vadd.f32 %v159, 0.00028619796
    %v161 = vmul.f32 %v158, %v160
    %v162 = vadd.f32 %v161, 0.0036580483
    %v163 = vmul.f32 %v158, %v162
    %v164 = vadd.f32 %v163, 0.05243302
    %v165 = vmul.f32 %v158, %v164
    %v166 = vadd.f32 %v165, 0.18741608
    %v167 = vmul.f32 %v158, %v166
    %v168 = vadd.f32 %v167, 1.1283791
    %v169 = vmul.f32 %v116, %v168
    %v170 = vmul.f32 %v158, 3.8918573e-05
    %v171 = vadd.f32 %v170, 0.001143296
    %v172 = vmul.f32 %v158, %v171
    %v173 = vadd.f32 %v172, 0.014752088
    %v174 = vmul.f32 %v158, %v173
    %v175 = vadd.f32 %v174, 0.112945676
    %v176 = vmul.f32 %v158, %v175
    %v177 = vadd.f32 %v176, 0.4994258
    %v178 = vmul.f32 %v158, %v177
    %v179 = vadd.f32 %v178, 1.0
    %v180 = vrcp.pop %v179
    %v181 = vmul.f32 %v179, %v180
    %v182 = vsub.f32 1.0, %v181
    %v183 = vmul.f32 %v180, %v182
    %v184 = vadd.f32 %v180, %v183
    %vm185 = vweird.f32 %v179
    %vm186 = vweird.f32 %v180
    %vm187 = vmor %vm185, %vm186
    %v188 = vsel %vm187, %v180, %v184
    %v189 = vand.u32 2147483647, %v179
    %vm190 = vcmp.eq.f32.partialorder %v189, 8.507059e+37
    %v191 = vand.u32 %v179, 2147483648
    %v192 = vor.u32 1.1754944e-38, %v191
    %v193 = vsel %vm190, %v192, %v188
    %v194 = vmul.f32 %v169, %v193
    %v195 = vmin.f32 %v194, 1.0
    %v196 = vmax.f32 %v195, -1.0
    %v197 = vadd.f32 %v156, 1.0
    %v198 = vadd.f32 %v196, 1.0
    %v199 = vmul.f32 %v113, %v197
    %v200 = vmul.f32 %v114, %v198
    %v201 = vld [vmem:[#allocation7] sm:$0xff]
    %v202 = vld [vmem:[#allocation7 + $0x8] sm:$0xff]
    %v203 = vld [vmem:[#allocation7 + $0x10] sm:$0xff]
    %v204 = vld [vmem:[#allocation7 + $0x18] sm:$0xff]
    %v205 = vld [vmem:[#allocation7 + $0x20] sm:$0xff]
    %v206 = vld [vmem:[#allocation7 + $0x28] sm:$0xff]
    %v207 = vld [vmem:[#allocation7 + $0x30] sm:$0xff]
    %v208 = vld [vmem:[#allocation7 + $0x38] sm:$0xff]
    %v209 = vld [vmem:[#allocation7 + $0x40] sm:$0xff]
    %v210 = vld [vmem:[#allocation7 + $0x48] sm:$0xff]
    %v211 = vld [vmem:[#allocation7 + $0x50] sm:$0xff]
    %v212 = vld [vmem:[#allocation7 + $0x58] sm:$0xff]
    %v213 = vld [vmem:[#allocation7 + $0x60] sm:$0xff]
    %v214 = vld [vmem:[#allocation7 + $0x68] sm:$0xff]
    %v215 = vld [vmem:[#allocation7 + $0x70] sm:$0xff]
    %v216 = vld [vmem:[#allocation7 + $0x78] sm:$0xff]
    %v217 = vld [vmem:[%s4] sm:$0x1]
    %v219 = vperm.slane %v217, 0
    %221 = vmatpush.msra.mxu0 %v216
    %222 = vmatpush.msra.mxu0 %v215
    %223 = vmatpush.msra.mxu0 %v214
    %224 = vmatpush.msra.mxu0 %v213
    %225 = vmatpush.msra.mxu0 %v212
    %226 = vmatpush.msra.mxu0 %v211
    %227 = vmatpush.msra.mxu0 %v210
    %228 = vmatpush.msra.mxu0 %v209
    %229 = vmatpush.msra.mxu0 %v208
    %230 = vmatpush.msra.mxu0 %v207
    %231 = vmatpush.msra.mxu0 %v206
    %232 = vmatpush.msra.mxu0 %v205
    %233 = vmatpush.msra.mxu0 %v204
    %234 = vmatpush.msra.mxu0 %v203
    %235 = vmatpush.msra.mxu0 %v202
    %236 = vmatpush.msra.mxu0 %v201
    %237 = vmatmul.f32.gmra.mxu0 %v199
    %v238 = vpop.f32.mrf.mxu0
    %v239 = vadd.f32 %v219, %v238
    %240 = vmatmul.f32.gmra.mxu0 %v200
    %v241 = vpop.f32.mrf.mxu0
    %v242 = vadd.f32 %v219, %v241
    %243 = vdwg.mxu0
    %244 = vst [vmem:[#allocation8] sm:$0xff] %v239
    %245 = vst [vmem:[#allocation8 + $0x8] sm:$0xff] %v242
    // Predicated region
    $region34: #{tpu_custom_call.1} parent=1 // pred_check
      _
    $region35: #{tpu_custom_call.1} parent=1 // pred_check_branch
      %247 = sbr.rel (0) target = $region37
    $region36: #{tpu_custom_call.1} parent=1 // pred_region
      %249 = vsyncadd [#allocation4], 0
      %s250 = sshll.u32 [#allocation8], 4
      %s251 = int_to_ptr.vmem [resolvable:$true] %s250
      %s252 = sshll.u32 %s5, 4
      %s253 = int_to_ptr.hbm [resolvable:$true] %s252
      %258 = dma.vmem_to_hbm [thread:$0]  %s251, 256, %s253, [#allocation4], 128, 128, 8
    $region37: #{tpu_custom_call.1} parent=1 // pred_fallthru
      _
    // Predicated region
    $region38: #{tpu_custom_call.1} parent=1 // pred_check
      _
    $region39: #{tpu_custom_call.1} parent=1 // pred_check_branch
      %260 = sbr.rel (0) target = $region41
    $region40: #{tpu_custom_call.1} parent=1 // pred_region
      %262 = dma.done [#allocation4], 256
    $region41: #{tpu_custom_call.1} parent=1 // pred_fallthru
      _
    %263 = vsyncpa [#allocation3], 1
    %264 = vsyncpa [#allocation6], 1
    %265 = vsyncpa [#allocation4], 1

</llo_original>
